<compile_context>
chip_gen: v5e
topology: v5e:2x2
jax: 0.10.0
libtpu: 0.0.40
codegen_flags: <defaults>
</compile_context>

<pallas_src>
import functools
import math

import jax
import jax.numpy as jnp
from jax.experimental import pallas as pl
from jax.experimental.pallas import tpu as pltpu


def _attention_kernel(x_ref, w_ref, b_ref, o_ref, k_scratch, *, tq,
                      compute_dtype):
    # x: (NB, S, F)  w: (F, F)  b: (1, F)  o: (NB, Tq, F)  k_scratch: (NB, S, F)
    sq = pl.program_id(1)
    nb, s, f = x_ref.shape

    # Shared projection (queries == keys), computed once per batch block.
    # The 1/sqrt(F) attention scale is pre-folded into W/b (as sqrt(scale))
    # by the wrapper, so scores need no extra scaling here.
    @pl.when(sq == 0)
    def _():
        x_flat = x_ref[...].reshape(nb * s, f).astype(compute_dtype)
        proj = jnp.dot(x_flat, w_ref[...].astype(compute_dtype),
                       preferred_element_type=jnp.float32)
        proj = proj + b_ref[...]                                  # (NB*S, F) f32
        k_scratch[...] = proj.reshape(nb, s, f)

    k_all = k_scratch[...]                                        # (NB, S, F) f32
    if tq == s:
        q = k_all                                                 # single query tile
    else:
        q_start = pl.multiple_of(sq * tq, tq)
        q = jax.lax.dynamic_slice_in_dim(k_all, q_start, tq, axis=1)

    # scores = Q @ K^T (scale already folded in).
    scores = jnp.einsum('bqf,bkf->bqk',
                        q.astype(compute_dtype), k_all.astype(compute_dtype),
                        preferred_element_type=jnp.float32)       # (NB, Tq, S)

    # Numerically stable softmax with DEFERRED normalization (divide after PV).
    m = jnp.max(scores, axis=-1, keepdims=True)
    e = jnp.exp(scores - m)                                       # (NB, Tq, S) f32
    rowsum = jnp.sum(e, axis=-1, keepdims=True)                   # (NB, Tq, 1)

    # attended_unnormalized = e @ values (values = raw features).
    attended = jnp.einsum('bqk,bkf->bqf',
                          e.astype(compute_dtype),
                          x_ref[...].astype(compute_dtype),
                          preferred_element_type=jnp.float32)     # (NB, Tq, F)

    o_ref[...] = (attended * pl.reciprocal(rowsum, approx=False)
                  ).astype(o_ref.dtype)


def _vmem_bytes(nb, s, f, tq, itemsize=4):
    """Rough per-step VMEM footprint used for tile selection / vmem limit."""
    x_blk = 2 * nb * s * f * itemsize       # double-buffered input tile
    o_blk = 2 * nb * tq * f * itemsize      # double-buffered output tile
    w_blk = 2 * f * f * itemsize            # weight buffers (constant index_map)
    k_scr = nb * s * f * itemsize           # projected Q/K scratch
    s_tmp = 2 * nb * tq * s * itemsize      # scores + exp temporaries
    a_tmp = 2 * nb * tq * f * itemsize      # attended / normalized temporaries
    return x_blk + o_blk + w_blk + k_scr + s_tmp + a_tmp


_VMEM_BUDGET = 40 * 1024 * 1024  # headroom under v7x's 64 MiB physical VMEM


def _choose_tiles(b, s, f):
    """Pick (NB batch elements per step, Tq query tile)."""
    # Query tile: whole sequence if small, else the largest power-of-two
    # divisor of S up to 512 (multiple of 8 for sublane tiling).
    if s <= 512:
        tq = s
    else:
        tq = next((c for c in (512, 256, 128, 64, 32, 16, 8) if s % c == 0), s)

    # Batch block: grow NB (a divisor of B) until the flattened projection
    # M-dim (NB*S) reaches ~256 or the VMEM budget would be exceeded.
    nb = 1
    for d in range(1, b + 1):
        if b % d != 0:
            continue
        if _vmem_bytes(d, s, f, tq) > _VMEM_BUDGET:
            break
        nb = d
        if d * s >= 256:
            break
    return nb, tq


def attention_forward(features, w, b, *, use_bf16_matmul=False):
    """Pallas forward for AttentionModule.

    features: (B, S, F) float32
    w:        (F, F)   float32, stored (in_features, out_features)
    b:        (1, F)   float32
    returns   (B, S, F) float32
    """
    B, S, F = features.shape
    scale = 1.0 / math.sqrt(F)          # torch uses features.size(-1) == F
    sqrt_scale = math.sqrt(scale)

    # Fold the attention scale into the projection (Q and K both carry
    # sqrt(scale), so Q@K^T carries scale) — removes an S^2 VPU multiply.
    w_s = (w * jnp.float32(sqrt_scale)).astype(jnp.float32)
    b_s = (jnp.asarray(b, jnp.float32).reshape(1, F) * jnp.float32(sqrt_scale))

    nb, tq = _choose_tiles(B, S, F)
    grid = (B // nb, S // tq)

    est = _vmem_bytes(nb, S, F, tq)
    vmem_limit = int(min(64 * 1024 * 1024,
                         max(32 * 1024 * 1024, int(1.5 * est))))

    compute_dtype = jnp.bfloat16 if use_bf16_matmul else jnp.float32

    flops = B * (2 * S * F * F + 2 * S * S * F + 2 * S * S * F)
    bytes_accessed = 4 * (2 * B * S * F + F * F + F)

    # TODO(synk): consider pipeline_mode=pl.Buffered(1) on the W BlockSpec to
    # drop its second pipeline buffer at large F (constant index_map already
    # avoids re-DMA).
    out = pl.pallas_call(
        functools.partial(_attention_kernel, tq=tq,
                          compute_dtype=compute_dtype),
        out_shape=jax.ShapeDtypeStruct((B, S, F), jnp.float32),
        grid=grid,
        in_specs=[
            # Full sequence (keys/values) for NB batch elements per step.
            pl.BlockSpec((nb, S, F), lambda bi, sq: (bi, 0, 0)),
            # Weights / bias: constant index_map -> VMEM-resident.
            pl.BlockSpec((F, F), lambda bi, sq: (0, 0)),
            pl.BlockSpec((1, F), lambda bi, sq: (0, 0)),
        ],
        out_specs=pl.BlockSpec((nb, tq, F), lambda bi, sq: (bi, sq, 0)),
        scratch_shapes=[pltpu.VMEM((nb, S, F), jnp.float32)],
        compiler_params=pltpu.CompilerParams(
            dimension_semantics=("parallel", "arbitrary"),
            vmem_limit_bytes=vmem_limit),
        cost_estimate=pl.CostEstimate(
            flops=flops,
            transcendentals=B * S * S,
            bytes_accessed=bytes_accessed),
    )(features, w_s, b_s)

    return out


def init_params(key, feature_size):
    """Deterministic init mimicking torch nn.Linear's uniform fan-in scaling."""
    k_w, k_b = jax.random.split(key)
    bound = 1.0 / math.sqrt(feature_size)
    w = jax.random.uniform(k_w, (feature_size, feature_size), jnp.float32,
                           -bound, bound)
    b = jax.random.uniform(k_b, (1, feature_size), jnp.float32, -bound, bound)
    return w, b


if __name__ == "__main__":
    batch, seq, feat = 2, 8, 32

    key = jax.random.PRNGKey(0)
    k_in, k_params = jax.random.split(key)

    features = jax.random.normal(k_in, (batch, seq, feat), jnp.float32)
    w, b = init_params(k_params, feat)

    out = attention_forward(features, w, b)
    out = jax.block_until_ready(out)

    # Pure-JAX reference of the same math.
    qk = features @ w + b                                   # queries == keys
    scores = jnp.einsum('bqf,bkf->bqk', qk, qk) / jnp.sqrt(jnp.float32(feat))
    weights = jax.nn.softmax(scores, axis=-1)
    ref = jnp.einsum('bqk,bkf->bqf', weights, features)

    assert out.shape == (batch, seq, feat)
    assert jnp.allclose(out, ref, atol=1e-4, rtol=1e-4)

    print("KERNEL_OK")
</pallas_src>

<mosaic_0001>
module attributes {stable_mosaic.version = 11 : i64} {
  func.func @_attention_kernel(%arg0: i32, %arg1: i32, %arg2: memref<2x8x32xf32, #tpu.memory_space<vmem>>, %arg3: memref<32x32xf32, #tpu.memory_space<vmem>>, %arg4: memref<1x32xf32, #tpu.memory_space<vmem>>, %arg5: memref<2x8x32xf32, #tpu.memory_space<vmem>>, %arg6: memref<2x8x32xf32, #tpu.memory_space<vmem>>) attributes {dimension_semantics = [#tpu.dimension_semantics<parallel>, #tpu.dimension_semantics<arbitrary>], iteration_bounds = array<i64: 1, 1>, scalar_prefetch = 0 : i64, scratch_operands = 1 : i64, tpu.core_type = #tpu.core_type<tc>, window_params = [{transform_indices = @transform_0, window_bounds = array<i64: 2, 8, 32>}, {pipeline_mode = #tpu.pipeline_mode<synchronous>, transform_indices = @transform_1, window_bounds = array<i64: 32, 32>}, {pipeline_mode = #tpu.pipeline_mode<synchronous>, transform_indices = @transform_2, window_bounds = array<i64: 1, 32>}, {transform_indices = @transform_3, window_bounds = array<i64: 2, 8, 32>}]} {
    %c0_i32 = arith.constant 0 : i32
    %0 = arith.cmpi eq, %arg1, %c0_i32 : i32
    %1 = arith.extui %0 : i1 to i32
    %c0_i32_0 = arith.constant 0 : i32
    %2 = arith.cmpi ne, %1, %c0_i32_0 : i32
    scf.if %2 {
      %c0_12 = arith.constant 0 : index
      %c0_13 = arith.constant 0 : index
      %c0_14 = arith.constant 0 : index
      %18 = vector.load %arg2[%c0_12, %c0_13, %c0_14] : memref<2x8x32xf32, #tpu.memory_space<vmem>>, vector<2x8x32xf32>
      %19 = vector.shape_cast %18 : vector<2x8x32xf32> to vector<16x32xf32>
      %c0_15 = arith.constant 0 : index
      %c0_16 = arith.constant 0 : index
      %20 = vector.load %arg3[%c0_15, %c0_16] : memref<32x32xf32, #tpu.memory_space<vmem>>, vector<32x32xf32>
      %cst_17 = arith.constant dense<0.000000e+00> : vector<16x32xf32>
      %21 = tpu.matmul %19, %20, %cst_17 {dimension_numbers = #tpu.dot_dimension_numbers<[1], [0], [0], [1], [0, 0, 1, 1], [], []>} : vector<16x32xf32>, vector<32x32xf32>, vector<16x32xf32> -> vector<16x32xf32>
      %c0_18 = arith.constant 0 : index
      %c0_19 = arith.constant 0 : index
      %22 = vector.load %arg4[%c0_18, %c0_19] : memref<1x32xf32, #tpu.memory_space<vmem>>, vector<1x32xf32>
      %23 = vector.broadcast %22 : vector<1x32xf32> to vector<16x32xf32>
      %24 = arith.addf %21, %23 : vector<16x32xf32>
      %25 = vector.shape_cast %24 : vector<16x32xf32> to vector<2x8x32xf32>
      %c0_20 = arith.constant 0 : index
      %c0_21 = arith.constant 0 : index
      %c0_22 = arith.constant 0 : index
      %26 = vector.load %arg6[%c0_20, %c0_21, %c0_22] : memref<2x8x32xf32, #tpu.memory_space<vmem>>, vector<2x8x32xf32>
      tpu.vector_store %arg6[%c0_20, %c0_21, %c0_22], %25 {strides = array<i32>} : memref<2x8x32xf32, #tpu.memory_space<vmem>>, vector<2x8x32xf32>,
    } else {
    }
    %c0 = arith.constant 0 : index
    %c0_1 = arith.constant 0 : index
    %c0_2 = arith.constant 0 : index
    %3 = vector.load %arg6[%c0, %c0_1, %c0_2] : memref<2x8x32xf32, #tpu.memory_space<vmem>>, vector<2x8x32xf32>
    "tpu.trace_start"() <{level = 10 : i32, message = "bqf,bkf->bqk"}> : () -> ()
    %cst = arith.constant dense<0.000000e+00> : vector<2x8x8xf32>
    %4 = tpu.matmul %3, %3, %cst {dimension_numbers = #tpu.dot_dimension_numbers<[2], [2], [1], [1], [0, 0, 0, 1, 1, 1], [0], [0]>} : vector<2x8x32xf32>, vector<2x8x32xf32>, vector<2x8x8xf32> -> vector<2x8x8xf32>
    "tpu.trace_stop"() : () -> ()
    %cst_3 = arith.constant dense<0xFF800000> : vector<2x8xf32>
    %5 = vector.multi_reduction <maximumf>, %4, %cst_3 [2] : vector<2x8x8xf32> to vector<2x8xf32>
    %6 = vector.shape_cast %5 : vector<2x8xf32> to vector<2x8x1xf32>
    %7 = vector.broadcast %6 : vector<2x8x1xf32> to vector<2x8x8xf32>
    %8 = arith.subf %4, %7 : vector<2x8x8xf32>
    %9 = math.exp %8 : vector<2x8x8xf32>
    %cst_4 = arith.constant dense<0.000000e+00> : vector<2x8xf32>
    %10 = vector.multi_reduction <add>, %9, %cst_4 [2] : vector<2x8x8xf32> to vector<2x8xf32>
    %11 = vector.shape_cast %10 : vector<2x8xf32> to vector<2x8x1xf32>
    %c0_5 = arith.constant 0 : index
    %c0_6 = arith.constant 0 : index
    %c0_7 = arith.constant 0 : index
    %12 = vector.load %arg2[%c0_5, %c0_6, %c0_7] : memref<2x8x32xf32, #tpu.memory_space<vmem>>, vector<2x8x32xf32>
    "tpu.trace_start"() <{level = 10 : i32, message = "bqk,bkf->bqf"}> : () -> ()
    %cst_8 = arith.constant dense<0.000000e+00> : vector<2x8x32xf32>
    %13 = tpu.matmul %9, %12, %cst_8 {dimension_numbers = #tpu.dot_dimension_numbers<[2], [1], [1], [2], [0, 0, 0, 1, 1, 2], [0], [0]>} : vector<2x8x8xf32>, vector<2x8x32xf32>, vector<2x8x32xf32> -> vector<2x8x32xf32>
    "tpu.trace_stop"() : () -> ()
    %14 = tpu.reciprocal %11 : vector<2x8x1xf32> -> vector<2x8x1xf32>
    %15 = vector.broadcast %14 : vector<2x8x1xf32> to vector<2x8x32xf32>
    %16 = arith.mulf %13, %15 : vector<2x8x32xf32>
    %c0_9 = arith.constant 0 : index
    %c0_10 = arith.constant 0 : index
    %c0_11 = arith.constant 0 : index
    %17 = vector.load %arg5[%c0_9, %c0_10, %c0_11] : memref<2x8x32xf32, #tpu.memory_space<vmem>>, vector<2x8x32xf32>
    tpu.vector_store %arg5[%c0_9, %c0_10, %c0_11], %16 {strides = array<i32>} : memref<2x8x32xf32, #tpu.memory_space<vmem>>, vector<2x8x32xf32>,
    return
  }
  func.func @transform_0(%arg0: i32, %arg1: i32) -> (i32, i32, i32) {
    %c0_i32 = arith.constant 0 : i32
    %c0_i32_0 = arith.constant 0 : i32
    %c0_i32_1 = arith.constant 0 : i32
    return %arg0, %c0_i32, %c0_i32_0 : i32, i32, i32
  }
  func.func @transform_1(%arg0: i32, %arg1: i32) -> (i32, i32) {
    %c0_i32 = arith.constant 0 : i32
    %c0_i32_0 = arith.constant 0 : i32
    %c0_i32_1 = arith.constant 0 : i32
    return %c0_i32, %c0_i32_0 : i32, i32
  }
  func.func @transform_2(%arg0: i32, %arg1: i32) -> (i32, i32) {
    %c0_i32 = arith.constant 0 : i32
    %c0_i32_0 = arith.constant 0 : i32
    %c0_i32_1 = arith.constant 0 : i32
    return %c0_i32, %c0_i32_0 : i32, i32
  }
  func.func @transform_3(%arg0: i32, %arg1: i32) -> (i32, i32, i32) {
    %c0_i32 = arith.constant 0 : i32
    %c0_i32_0 = arith.constant 0 : i32
    return %arg0, %arg1, %c0_i32 : i32, i32, i32
  }
}

</mosaic_0001>

<llo_original>
// kernel: tpu_custom_call.1
$region0: #{tpu_custom_call.1}
  #allocation0 [shape = 'u32[]', space=smem, size = 0x4, offset = 0x4, fixed_abs, tag = 'smem constant byte address 0x4 - core index']
  #allocation1 [shape = 'u32[72,128]{1,0:T(1,128)}', space=vmem, size = 0x9000, scoped, tag = 'internal scratch']
  #allocation2 [shape = 'f32[2,8,32]{2,1,0:T(8,128)}', space=vmem, size = 0x2000, scoped, tag = 'scratch operand']
  %s0 = inlined_call_operand.hbm [shape: f32[2,8,32], index: 0, kind: input, shape index: {}]
  %s1 = inlined_call_operand.hbm [shape: f32[32,32], index: 1, kind: input, shape index: {}]
  %s2 = inlined_call_operand.vmem [shape: f32[1,32], index: 2, kind: input, shape index: {}]
  %s3 = inlined_call_operand.hbm [shape: f32[2,8,32], index: 3, kind: output, shape index: {}]
  %s4 = sld [smem:[#allocation0]]
  $region34: #{tpu_custom_call.1} parent=0
    _
  %s6 = ssub.s32 1, %s4
  %s7 = scalar_select 0, %s6, %s4
  $region1: #{tpu_custom_call.1} parent=0
    #allocation3 [shape = 'u8[8192]{0}', space=vmem, size = 0x2000, scoped, tag = 'input window, operand 0, single buffered']
    #allocation4 [shape = 's32[1]{0}', space=sflag, size = 0x4, scoped, tag = 'scoped memory for tpu_custom_call.1']
    #allocation5 [shape = 's32[1]{0}', space=sflag, size = 0x4, scoped, tag = 'scoped memory for tpu_custom_call.1']
    #allocation6 [shape = 'u8[16384]{0}', space=vmem, size = 0x4000, scoped, tag = 'input window, operand 1, single buffered']
    #allocation7 [shape = 's32[1]{0}', space=sflag, size = 0x4, scoped, tag = 'scoped memory for tpu_custom_call.1']
    #allocation8 [shape = 'u8[8192]{0}', space=vmem, size = 0x2000, scoped, tag = 'output window, operand 0, single buffered']
    %8 = vsyncpa [#allocation4], 0
    %9 = vsyncpa [#allocation7], 0
    %10 = vsyncpa [#allocation5], 0
    // Predicated region
    $region2: #{tpu_custom_call.1} parent=1 // pred_check
      _
    $region3: #{tpu_custom_call.1} parent=1 // pred_check_branch
      %12 = sbr.rel (0) target = $region5
    $region4: #{tpu_custom_call.1} parent=1 // pred_region
      %14 = vsyncadd [#allocation4], 0
      %s15 = sshll.u32 %s0, 4
      %s16 = int_to_ptr.hbm [resolvable:$true] %s15
      %s17 = sshll.u32 [#allocation3], 4
      %s18 = int_to_ptr.vmem [resolvable:$true] %s17
      %23 = dma.hbm_to_vmem [thread:$0]  %s16, 256, %s18, [#allocation4], 128, 128, 8
    $region5: #{tpu_custom_call.1} parent=1 // pred_fallthru
      _
    // Predicated region
    $region6: #{tpu_custom_call.1} parent=1 // pred_check
      _
    $region7: #{tpu_custom_call.1} parent=1 // pred_check_branch
      %25 = sbr.rel (0) target = $region9
    $region8: #{tpu_custom_call.1} parent=1 // pred_region
      %27 = vsyncadd [#allocation7], 0
      %s28 = sshll.u32 %s1, 4
      %s29 = int_to_ptr.hbm [resolvable:$true] %s28
      %s30 = sshll.u32 [#allocation6], 4
      %s31 = int_to_ptr.vmem [resolvable:$true] %s30
      %36 = dma.hbm_to_vmem [thread:$0]  %s29, 512, %s31, [#allocation7], 128, 128, 8
    $region9: #{tpu_custom_call.1} parent=1 // pred_fallthru
      _
    // Predicated region
    $region10: #{tpu_custom_call.1} parent=1 // pred_check
      _
    $region11: #{tpu_custom_call.1} parent=1 // pred_check_branch
      %38 = sbr.rel (0) target = $region13
    $region12: #{tpu_custom_call.1} parent=1 // pred_region
      _
    $region13: #{tpu_custom_call.1} parent=1 // pred_fallthru
      _
    // Predicated region
    $region14: #{tpu_custom_call.1} parent=1 // pred_check
      _
    $region15: #{tpu_custom_call.1} parent=1 // pred_check_branch
      %40 = sbr.rel (0) target = $region17
    $region16: #{tpu_custom_call.1} parent=1 // pred_region
      %42 = dma.done [#allocation4], 256
    $region17: #{tpu_custom_call.1} parent=1 // pred_fallthru
      _
    // Predicated region
    $region18: #{tpu_custom_call.1} parent=1 // pred_check
      _
    $region19: #{tpu_custom_call.1} parent=1 // pred_check_branch
      %44 = sbr.rel (0) target = $region21
    $region20: #{tpu_custom_call.1} parent=1 // pred_region
      %46 = dma.done [#allocation7], 512
    $region21: #{tpu_custom_call.1} parent=1 // pred_fallthru
      _
    %p47 = scmp.eq.s32.totalorder 0, 0
    // Predicated region
    $region22: #{tpu_custom_call.1} parent=1 // pred_check
      %p48 = pneg %p47
    $region23: #{tpu_custom_call.1} parent=1 // pred_check_branch
      %50 = sbr.rel (%p48) target = $region25
    $region24: #{tpu_custom_call.1} parent=1 // pred_region
      %v51 = vld [vmem:[#allocation3] sm:$0xff]
      %v52 = vld [vmem:[#allocation3 + $0x8] sm:$0xff]
      %v53 = vld [vmem:[#allocation6] sm:$0xff]
      %v54 = vld [vmem:[#allocation6 + $0x8] sm:$0xff]
      %v55 = vld [vmem:[#allocation6 + $0x10] sm:$0xff]
      %v56 = vld [vmem:[#allocation6 + $0x18] sm:$0xff]
      %v57 = vld [vmem:[%s2] sm:$0x1]
      %v59 = vperm.slane %v57, 0
      %vm61 = vcmask 261120
      %v63 = vsel %vm61, %v51, 0
      %v66 = vsel %vm61, %v52, 0
      %68 = vmatpush.msra.mxu0 0.0
      %69 = vmatpush.msra.mxu0 0.0
      %70 = vmatpush.msra.mxu0 0.0
      %71 = vmatpush.msra.mxu0 0.0
      %72 = vmatpush.msra.mxu0 0.0
      %73 = vmatpush.msra.mxu0 0.0
      %74 = vmatpush.msra.mxu0 0.0
      %75 = vmatpush.msra.mxu0 0.0
      %76 = vmatpush.msra.mxu0 0.0
      %77 = vmatpush.msra.mxu0 0.0
      %78 = vmatpush.msra.mxu0 0.0
      %79 = vmatpush.msra.mxu0 0.0
      %80 = vmatpush.msra.mxu0 %v56
      %81 = vmatpush.msra.mxu0 %v55
      %82 = vmatpush.msra.mxu0 %v54
      %83 = vmatpush.msra.mxu0 %v53
      %84 = vmatmul.f32.gmra.mxu0 %v63
      %v85 = vpop.f32.mrf.mxu0
      %v86 = vadd.f32 %v59, %v85
      %87 = vmatmul.f32.gmra.mxu0 %v66
      %v88 = vpop.f32.mrf.mxu0
      %v89 = vadd.f32 %v59, %v88
      %90 = vdwg.mxu0
      %91 = vst.msk [vmem:[#allocation2] sm:$0xff] %vm61, %v86
      %92 = vst.msk [vmem:[#allocation2 + $0x8] sm:$0xff] %vm61, %v89
    $region25: #{tpu_custom_call.1} parent=1 // pred_fallthru
      _
    %v93 = vld [vmem:[#allocation2] sm:$0xff]
    %v94 = vld [vmem:[#allocation2 + $0x8] sm:$0xff]
    %vm95 = vcmask 261120
    %v97 = vsel %vm95, %v93, 0
    %99 = vmatpush.xpose.msra.mxu0 0.0
    %100 = vmatpush.xpose.msra.mxu0 0.0
    %101 = vmatpush.xpose.msra.mxu0 0.0
    %102 = vmatpush.xpose.msra.mxu0 0.0
    %103 = vmatpush.xpose.msra.mxu0 0.0
    %104 = vmatpush.xpose.msra.mxu0 0.0
    %105 = vmatpush.xpose.msra.mxu0 0.0
    %106 = vmatpush.xpose.msra.mxu0 0.0
    %107 = vmatpush.xpose.msra.mxu0 0.0
    %108 = vmatpush.xpose.msra.mxu0 0.0
    %109 = vmatpush.xpose.msra.mxu0 0.0
    %110 = vmatpush.xpose.msra.mxu0 0.0
    %111 = vmatpush.xpose.msra.mxu0 0.0
    %112 = vmatpush.xpose.msra.mxu0 0.0
    %113 = vmatpush.xpose.msra.mxu0 0.0
    %114 = vmatpush.xpose.msra.mxu0 %v97
    %115 = vmatmul.f32.gmra.mxu0 %v97
    %v116 = vpop.f32.mrf.mxu0
    %v117 = vadd.f32 0.0, %v116
    %118 = vdwg.mxu0
    %v120 = vsel %vm95, %v94, 0
    %122 = vmatpush.xpose.msra.mxu0 0.0
    %123 = vmatpush.xpose.msra.mxu0 0.0
    %124 = vmatpush.xpose.msra.mxu0 0.0
    %125 = vmatpush.xpose.msra.mxu0 0.0
    %126 = vmatpush.xpose.msra.mxu0 0.0
    %127 = vmatpush.xpose.msra.mxu0 0.0
    %128 = vmatpush.xpose.msra.mxu0 0.0
    %129 = vmatpush.xpose.msra.mxu0 0.0
    %130 = vmatpush.xpose.msra.mxu0 0.0
    %131 = vmatpush.xpose.msra.mxu0 0.0
    %132 = vmatpush.xpose.msra.mxu0 0.0
    %133 = vmatpush.xpose.msra.mxu0 0.0
    %134 = vmatpush.xpose.msra.mxu0 0.0
    %135 = vmatpush.xpose.msra.mxu0 0.0
    %136 = vmatpush.xpose.msra.mxu0 0.0
    %137 = vmatpush.xpose.msra.mxu0 %v120
    %138 = vmatmul.f32.gmra.mxu0 %v120
    %v139 = vpop.f32.mrf.mxu0
    %v140 = vadd.f32 0.0, %v139
    %141 = vdwg.mxu0
    %vm142 = vcmask 64512
    %v143 = vsel %vm142, %v117, -inf
    %144 = vmax.xlane.f32.xlu0 %v143
    %v145 = vpop.xlane.xlu0 %144
    %v146 = vsel %vm142, %v140, -inf
    %147 = vmax.xlane.f32.xlu0 %v146
    %v148 = vpop.xlane.xlu0 %147
    %v149 = vsub.f32 %v117, %v145
    %v150 = vsub.f32 %v140, %v148
    %v151 = vmul.f32 %v149, 1.442695
    %v152 = vpow.pop %v151
    %v153 = vmul.f32 %v150, 1.442695
    %v154 = vpow.pop %v153
    %v155 = vsel %vm142, %v152, 0.0
    %156 = vadd.xlane.f32.xlu0 %v155
    %v157 = vpop.xlane.xlu0 %156
    %v158 = vsel %vm142, %v154, 0.0
    %159 = vadd.xlane.f32.xlu0 %v158
    %v160 = vpop.xlane.xlu0 %159
    %v161 = vld [vmem:[#allocation3] sm:$0xff]
    %v162 = vld [vmem:[#allocation3 + $0x8] sm:$0xff]
    %v164 = vsel %vm142, %v152, 0
    %166 = vmatpush.msra.mxu0 0.0
    %167 = vmatpush.msra.mxu0 0.0
    %168 = vmatpush.msra.mxu0 0.0
    %169 = vmatpush.msra.mxu0 0.0
    %170 = vmatpush.msra.mxu0 0.0
    %171 = vmatpush.msra.mxu0 0.0
    %172 = vmatpush.msra.mxu0 0.0
    %173 = vmatpush.msra.mxu0 0.0
    %174 = vmatpush.msra.mxu0 0.0
    %175 = vmatpush.msra.mxu0 0.0
    %176 = vmatpush.msra.mxu0 0.0
    %177 = vmatpush.msra.mxu0 0.0
    %178 = vmatpush.msra.mxu0 0.0
    %179 = vmatpush.msra.mxu0 0.0
    %180 = vmatpush.msra.mxu0 0.0
    %181 = vmatpush.msra.mxu0 %v161
    %182 = vmatmul.f32.gmra.mxu0 %v164
    %v183 = vpop.f32.mrf.mxu0
    %v184 = vadd.f32 0.0, %v183
    %185 = vdwg.mxu0
    %v187 = vsel %vm142, %v154, 0
    %189 = vmatpush.msra.mxu0 0.0
    %190 = vmatpush.msra.mxu0 0.0
    %191 = vmatpush.msra.mxu0 0.0
    %192 = vmatpush.msra.mxu0 0.0
    %193 = vmatpush.msra.mxu0 0.0
    %194 = vmatpush.msra.mxu0 0.0
    %195 = vmatpush.msra.mxu0 0.0
    %196 = vmatpush.msra.mxu0 0.0
    %197 = vmatpush.msra.mxu0 0.0
    %198 = vmatpush.msra.mxu0 0.0
    %199 = vmatpush.msra.mxu0 0.0
    %200 = vmatpush.msra.mxu0 0.0
    %201 = vmatpush.msra.mxu0 0.0
    %202 = vmatpush.msra.mxu0 0.0
    %203 = vmatpush.msra.mxu0 0.0
    %204 = vmatpush.msra.mxu0 %v162
    %205 = vmatmul.f32.gmra.mxu0 %v187
    %v206 = vpop.f32.mrf.mxu0
    %v207 = vadd.f32 0.0, %v206
    %208 = vdwg.mxu0
    %v209 = vrcp.pop %v157
    %v210 = vmul.f32 %v157, %v209
    %v211 = vsub.f32 1.0, %v210
    %v212 = vmul.f32 %v209, %v211
    %v213 = vadd.f32 %v209, %v212
    %vm214 = vweird.f32 %v157
    %vm215 = vweird.f32 %v209
    %vm216 = vmor %vm214, %vm215
    %v217 = vsel %vm216, %v209, %v213
    %v218 = vand.u32 2147483647, %v157
    %vm219 = vcmp.eq.f32.partialorder %v218, 8.507059e+37
    %v220 = vand.u32 %v157, 2147483648
    %v221 = vor.u32 1.1754944e-38, %v220
    %v222 = vsel %vm219, %v221, %v217
    %v223 = vrcp.pop %v160
    %v224 = vmul.f32 %v160, %v223
    %v225 = vsub.f32 1.0, %v224
    %v226 = vmul.f32 %v223, %v225
    %v227 = vadd.f32 %v223, %v226
    %vm228 = vweird.f32 %v160
    %vm229 = vweird.f32 %v223
    %vm230 = vmor %vm228, %vm229
    %v231 = vsel %vm230, %v223, %v227
    %v232 = vand.u32 2147483647, %v160
    %vm233 = vcmp.eq.f32.partialorder %v232, 8.507059e+37
    %v234 = vand.u32 %v160, 2147483648
    %v235 = vor.u32 1.1754944e-38, %v234
    %v236 = vsel %vm233, %v235, %v231
    %v237 = vmul.f32 %v184, %v222
    %v238 = vmul.f32 %v207, %v236
    %239 = vst.msk [vmem:[#allocation8] sm:$0xff] %vm95, %v237
    %240 = vst.msk [vmem:[#allocation8 + $0x8] sm:$0xff] %vm95, %v238
    // Predicated region
    $region26: #{tpu_custom_call.1} parent=1 // pred_check
      _
    $region27: #{tpu_custom_call.1} parent=1 // pred_check_branch
      %242 = sbr.rel (0) target = $region29
    $region28: #{tpu_custom_call.1} parent=1 // pred_region
      %244 = vsyncadd [#allocation5], 0
      %s245 = sshll.u32 [#allocation8], 4
      %s246 = int_to_ptr.vmem [resolvable:$true] %s245
      %s247 = sshll.u32 %s3, 4
      %s248 = int_to_ptr.hbm [resolvable:$true] %s247
      %253 = dma.vmem_to_hbm [thread:$0]  %s246, 256, %s248, [#allocation5], 128, 128, 8
    $region29: #{tpu_custom_call.1} parent=1 // pred_fallthru
      _
    // Predicated region
    $region30: #{tpu_custom_call.1} parent=1 // pred_check
      _
    $region31: #{tpu_custom_call.1} parent=1 // pred_check_branch
      %255 = sbr.rel (0) target = $region33
    $region32: #{tpu_custom_call.1} parent=1 // pred_region
      %257 = dma.done [#allocation5], 256
    $region33: #{tpu_custom_call.1} parent=1 // pred_fallthru
      _
    %258 = vsyncpa [#allocation4], 1
    %259 = vsyncpa [#allocation7], 1
    %260 = vsyncpa [#allocation5], 1

</llo_original>
